<compile_context>
chip_gen: v7x
topology: tpu7x:2x2x1
jax: 0.10.0
libtpu: 0.0.40
codegen_flags: <defaults>
</compile_context>

<pallas_src>
import jax
import jax.numpy as jnp
from jax.experimental import pallas as pl
from jax.experimental.pallas import tpu as pltpu

_LANES = 128           # vreg lane width
_MAX_TILE_ROWS = 2048  # 2048*128*4 B = 1 MiB per input block per buffer


def _round_up(x, m):
    return (x + m - 1) // m * m


def _sse_partial_kernel(x_ref, y_ref, out_ref):
    # x_ref, y_ref: (TR, 128) VMEM tiles; out_ref: (1, 128) lane-dense partial
    # sums of squared differences for this tile.
    d = x_ref[...] - y_ref[...]
    out_ref[...] = jnp.sum(d * d, axis=0, keepdims=True)


def ab_loss(inp, target, coef=1.0):
    """Pallas equivalent of ABLoss.forward(input, target)."""
    assert inp.shape[1] == 2, "ABLoss expects 2-channel input"
    assert target.shape[1] == 2, "ABLoss expects 2-channel target"
    assert inp.shape == target.shape

    n = 1
    for s in inp.shape:
        n *= s

    x = inp.reshape(-1).astype(jnp.float32)
    y = target.reshape(-1).astype(jnp.float32)

    # Lane-dense (rows, 128) layout; sublane-align rows and pad up to a whole
    # number of row-tiles. Zero padding on BOTH operands contributes 0 to the
    # squared-difference sum, so only the divisor (true n) matters.
    rows = _round_up(max(1, -(-n // _LANES)), 8)
    tile_rows = min(_MAX_TILE_ROWS, rows)
    rows = _round_up(rows, tile_rows)
    num_tiles = rows // tile_rows
    padded = rows * _LANES

    if padded != n:
        x = jnp.pad(x, (0, padded - n))
        y = jnp.pad(y, (0, padded - n))
    x2 = x.reshape(rows, _LANES)
    y2 = y.reshape(rows, _LANES)

    partials = pl.pallas_call(
        _sse_partial_kernel,
        out_shape=jax.ShapeDtypeStruct((num_tiles, _LANES), jnp.float32),
        grid=(num_tiles,),
        in_specs=[
            pl.BlockSpec((tile_rows, _LANES), lambda i: (i, 0)),
            pl.BlockSpec((tile_rows, _LANES), lambda i: (i, 0)),
        ],
        out_specs=pl.BlockSpec((1, _LANES), lambda i: (i, 0)),
        compiler_params=pltpu.CompilerParams(
            dimension_semantics=("parallel",),
        ),
    )(x2, y2)

    # Finalize: total SSE -> mean -> coef scaling (trivial work, left in XLA).
    return coef * (jnp.sum(partials) / n)


if __name__ == "__main__":
    key = jax.random.PRNGKey(0)
    k1, k2 = jax.random.split(key)
    B, C, H, W = 2, 2, 16, 16                     # ABLoss requires C == 2
    inp = jax.random.uniform(k1, (B, C, H, W), dtype=jnp.float32)
    tgt = jax.random.uniform(k2, (B, C, H, W), dtype=jnp.float32)

    loss = ab_loss(inp, tgt, coef=1.0)
    jax.block_until_ready(loss)

    ref = jnp.mean((inp - tgt) ** 2)              # pure-JAX reference check
    assert jnp.allclose(loss, ref, rtol=1e-5, atol=1e-6), (loss, ref)
    print("KERNEL_OK")
</pallas_src>

<mosaic_0001>
module attributes {stable_mosaic.version = 11 : i64} {
  func.func @_sse_partial_kernel(%arg0: i32, %arg1: memref<8x128xf32, #tpu.memory_space<vmem>>, %arg2: memref<8x128xf32, #tpu.memory_space<vmem>>, %arg3: memref<1x128xf32, #tpu.memory_space<vmem>>) attributes {dimension_semantics = [#tpu.dimension_semantics<parallel>], iteration_bounds = array<i64: 1>, scalar_prefetch = 0 : i64, scratch_operands = 0 : i64, tpu.core_type = #tpu.core_type<tc>, window_params = [{transform_indices = @transform_0, window_bounds = array<i64: 8, 128>}, {transform_indices = @transform_1, window_bounds = array<i64: 8, 128>}, {transform_indices = @transform_2, window_bounds = array<i64: 1, 128>}]} {
    %c0 = arith.constant 0 : index
    %c0_0 = arith.constant 0 : index
    %0 = vector.load %arg1[%c0, %c0_0] : memref<8x128xf32, #tpu.memory_space<vmem>>, vector<8x128xf32>
    %c0_1 = arith.constant 0 : index
    %c0_2 = arith.constant 0 : index
    %1 = vector.load %arg2[%c0_1, %c0_2] : memref<8x128xf32, #tpu.memory_space<vmem>>, vector<8x128xf32>
    %2 = arith.subf %0, %1 : vector<8x128xf32>
    %3 = arith.mulf %2, %2 : vector<8x128xf32>
    %cst = arith.constant dense<0.000000e+00> : vector<128xf32>
    %4 = vector.multi_reduction <add>, %3, %cst [0] : vector<8x128xf32> to vector<128xf32>
    %5 = vector.shape_cast %4 : vector<128xf32> to vector<1x128xf32>
    %c0_3 = arith.constant 0 : index
    %c0_4 = arith.constant 0 : index
    %6 = vector.load %arg3[%c0_3, %c0_4] : memref<1x128xf32, #tpu.memory_space<vmem>>, vector<1x128xf32>
    tpu.vector_store %arg3[%c0_3, %c0_4], %5 {strides = array<i32>} : memref<1x128xf32, #tpu.memory_space<vmem>>, vector<1x128xf32>,
    return
  }
  func.func @transform_0(%arg0: i32) -> (i32, i32) {
    %c0_i32 = arith.constant 0 : i32
    %c0_i32_0 = arith.constant 0 : i32
    return %arg0, %c0_i32 : i32, i32
  }
  func.func @transform_1(%arg0: i32) -> (i32, i32) {
    %c0_i32 = arith.constant 0 : i32
    %c0_i32_0 = arith.constant 0 : i32
    return %arg0, %c0_i32 : i32, i32
  }
  func.func @transform_2(%arg0: i32) -> (i32, i32) {
    %c0_i32 = arith.constant 0 : i32
    %c0_i32_0 = arith.constant 0 : i32
    return %arg0, %c0_i32 : i32, i32
  }
}

</mosaic_0001>

<llo_original>
// kernel: tpu_custom_call.1
$region0: #{tpu_custom_call.1}
  #allocation0 [shape = 'u32[]', space=smem, size = 0x4, offset = 0x4, fixed_abs, tag = 'smem constant byte address 0x4 - core index']
  #allocation1 [shape = 'u32[144,128]{1,0:T(1,128)}', space=vmem, size = 0x12000, scoped, tag = 'internal scratch']
  %s0 = inlined_call_operand.hbm [shape: f32[8,128], index: 0, kind: input, shape index: {}]
  %s1 = inlined_call_operand.hbm [shape: f32[8,128], index: 1, kind: input, shape index: {}]
  %s2 = inlined_call_operand.hbm [shape: f32[1,128], index: 2, kind: output, shape index: {}]
  %s3 = sld [smem:[#allocation0]]
  $region26: #{tpu_custom_call.1} parent=0
    _
  %s5 = ssub.s32 1, %s3
  %s6 = scalar_select 0, %s5, %s3
  $region1: #{tpu_custom_call.1} parent=0
    #allocation2 [shape = 'u8[4096]{0}', space=vmem, size = 0x1000, scoped, tag = 'input window, operand 0, single buffered']
    #allocation3 [shape = 's32[1]{0}', space=sflag, size = 0x4, scoped, tag = 'scoped memory for tpu_custom_call.1']
    #allocation4 [shape = 's32[1]{0}', space=sflag, size = 0x4, scoped, tag = 'scoped memory for tpu_custom_call.1']
    #allocation5 [shape = 'u8[4096]{0}', space=vmem, size = 0x1000, scoped, tag = 'input window, operand 1, single buffered']
    #allocation6 [shape = 's32[1]{0}', space=sflag, size = 0x4, scoped, tag = 'scoped memory for tpu_custom_call.1']
    #allocation7 [shape = 'u8[512]{0}', space=vmem, size = 0x400, scoped, tag = 'output window, operand 0, single buffered']
    %7 = vsyncpa [#allocation3], 0
    %8 = vsyncpa [#allocation6], 0
    %9 = vsyncpa [#allocation4], 0
    // Predicated region
    $region2: #{tpu_custom_call.1} parent=1 // pred_check
      _
    $region3: #{tpu_custom_call.1} parent=1 // pred_check_branch
      %11 = sbr.rel (0) target = $region5
    $region4: #{tpu_custom_call.1} parent=1 // pred_region
      %s13 = ssub.s32 128, 128
      %14 = vsyncadd [#allocation3], %s13
      %s16 = sshll.u32 [#allocation2], 4
      %s17 = int_to_ptr.vmem [resolvable:$true] %s16
      %19 = dma.hbm_to_vmem [thread:$0]  %s0, 128, %s17, [#allocation3]
    $region5: #{tpu_custom_call.1} parent=1 // pred_fallthru
      _
    // Predicated region
    $region6: #{tpu_custom_call.1} parent=1 // pred_check
      _
    $region7: #{tpu_custom_call.1} parent=1 // pred_check_branch
      %21 = sbr.rel (0) target = $region9
    $region8: #{tpu_custom_call.1} parent=1 // pred_region
      %s23 = ssub.s32 128, 128
      %24 = vsyncadd [#allocation6], %s23
      %s26 = sshll.u32 [#allocation5], 4
      %s27 = int_to_ptr.vmem [resolvable:$true] %s26
      %29 = dma.hbm_to_vmem [thread:$0]  %s1, 128, %s27, [#allocation6]
    $region9: #{tpu_custom_call.1} parent=1 // pred_fallthru
      _
    // Predicated region
    $region10: #{tpu_custom_call.1} parent=1 // pred_check
      _
    $region11: #{tpu_custom_call.1} parent=1 // pred_check_branch
      %31 = sbr.rel (0) target = $region13
    $region12: #{tpu_custom_call.1} parent=1 // pred_region
      %32 = dma.done [#allocation3], 128
    $region13: #{tpu_custom_call.1} parent=1 // pred_fallthru
      _
    // Predicated region
    $region14: #{tpu_custom_call.1} parent=1 // pred_check
      _
    $region15: #{tpu_custom_call.1} parent=1 // pred_check_branch
      %34 = sbr.rel (0) target = $region17
    $region16: #{tpu_custom_call.1} parent=1 // pred_region
      %35 = dma.done [#allocation6], 128
    $region17: #{tpu_custom_call.1} parent=1 // pred_fallthru
      _
    %v36 = vld [vmem:[#allocation2] sm:$0xff]
    %v37 = vld [vmem:[#allocation5] sm:$0xff]
    %v38 = vsub.f32 %v36, %v37
    %v39 = vmul.f32 %v38, %v38
    %v40 = vrot.slane %v39, 4
    %v41 = vadd.f32 %v39, %v40
    %v42 = vrot.slane %v41, 2
    %v43 = vadd.f32 %v41, %v42
    %v44 = vrot.slane %v43, 1
    %v45 = vadd.f32 %v43, %v44
    %46 = vst [vmem:[#allocation7] sm:$0x1] %v45
    // Predicated region
    $region18: #{tpu_custom_call.1} parent=1 // pred_check
      _
    $region19: #{tpu_custom_call.1} parent=1 // pred_check_branch
      %48 = sbr.rel (0) target = $region21
    $region20: #{tpu_custom_call.1} parent=1 // pred_region
      %s50 = ssub.s32 16, 16
      %51 = vsyncadd [#allocation4], %s50
      %s53 = sshll.u32 [#allocation7], 4
      %s54 = int_to_ptr.vmem [resolvable:$true] %s53
      %56 = dma.vmem_to_hbm [thread:$0]  %s54, 16, %s2, [#allocation4]
    $region21: #{tpu_custom_call.1} parent=1 // pred_fallthru
      _
    // Predicated region
    $region22: #{tpu_custom_call.1} parent=1 // pred_check
      _
    $region23: #{tpu_custom_call.1} parent=1 // pred_check_branch
      %58 = sbr.rel (0) target = $region25
    $region24: #{tpu_custom_call.1} parent=1 // pred_region
      %59 = dma.done [#allocation4], 16
    $region25: #{tpu_custom_call.1} parent=1 // pred_fallthru
      _
    %60 = vsyncpa [#allocation3], 1
    %61 = vsyncpa [#allocation6], 1
    %62 = vsyncpa [#allocation4], 1

</llo_original>
